<compile_context>
chip_gen: v7x
topology: tpu7x:2x2x1
jax: 0.10.0
libtpu: 0.0.40
codegen_flags: <defaults>
</compile_context>

<pallas_src>
import functools

import numpy as np
import jax
import jax.numpy as jnp
from jax.experimental import pallas as pl
from jax.experimental.pallas import tpu as pltpu

LANE = 128  # feature padding target / TPU lane width


# ----------------------------- Pallas kernel -----------------------------

def actor_kernel(x_ref, w1_ref, b1_ref, w2_ref, b2_ref, w3_ref, b3s_ref, o_ref,
                 *, tanh_dtype):
    cd = w1_ref.dtype                      # matmul operand dtype (bf16)
    x = x_ref[...].astype(cd)              # f32 -> bf16 cast done in-kernel
    # fc1 + ReLU  (bf16 operands, f32 accumulation on the MXU)
    h1 = jnp.dot(x, w1_ref[...], preferred_element_type=jnp.float32)
    h1 = jnp.maximum(h1 + b1_ref[...], 0.0)
    # fc2 + ReLU
    h2 = jnp.dot(h1.astype(cd), w2_ref[...], preferred_element_type=jnp.float32)
    h2 = jnp.maximum(h2 + b2_ref[...], 0.0)
    # fc3 + tanh + output affine.  b3s rows: [fc3 bias, action_range, action_low]
    b3s = b3s_ref[...]
    z = jnp.dot(h2.astype(cd), w3_ref[...], preferred_element_type=jnp.float32)
    a = jnp.tanh((z + b3s[0:1, :]).astype(tanh_dtype)).astype(jnp.float32)
    o_ref[...] = (a * b3s[1:2, :] + b3s[2:3, :]).astype(o_ref.dtype)


# ------------------------- wrapper / param prep -------------------------

def _pad2(a, rows, cols):
    out = jnp.zeros((rows, cols), a.dtype)
    return out.at[: a.shape[0], : a.shape[1]].set(a)


def prepare_actor_params(params, action_range, action_low,
                         compute_dtype=jnp.bfloat16, pad_to=LANE):
    """Zero-pad feature dims to `pad_to`, cast matmul weights to bf16, and pack
    fc3 bias / action_range / action_low into one (3, pad_to) f32 operand."""
    S = params["w1"].shape[0]
    A = params["w3"].shape[1]
    P = pad_to
    w1 = _pad2(params["w1"], S, P).astype(compute_dtype)      # (S, P)
    b1 = _pad2(params["b1"], 1, P)                            # (1, P) f32
    w2 = _pad2(params["w2"], P, P).astype(compute_dtype)      # (P, P)
    b2 = _pad2(params["b2"], 1, P)                            # (1, P) f32
    w3 = _pad2(params["w3"], P, P).astype(compute_dtype)      # (P, P)
    b3 = _pad2(params["b3"], 1, P)                            # (1, P) f32
    rng = _pad2(action_range.astype(jnp.float32), 1, P)       # padded lanes 0
    low = _pad2(action_low.astype(jnp.float32), 1, P)
    b3s = jnp.concatenate([b3, rng, low], axis=0)             # (3, P) f32
    return dict(w1=w1, b1=b1, w2=w2, b2=b2, w3=w3, b3s=b3s,
                state_size=S, action_size=A, pad=P,
                compute_dtype=compute_dtype)


def _tanh_dtype():
    """bf16 tanh on v6e/v7x (bf16 EUP); f32 elsewhere (v5e has no bf16 EUP)."""
    try:
        kind = jax.devices()[0].device_kind.lower()
    except Exception:
        return jnp.float32
    if "v6" in kind or "v7" in kind:
        return jnp.bfloat16
    return jnp.float32


def _choose_batch_tile(B):
    """256-row tiles feed the 256-deep MXUs on v6e/v7x and amortize grid-step
    overhead, but only once there are >=2 such tiles (keeps the "parallel"
    axis shardable across v7x's two TensorCores).  128 otherwise (also the
    clean mapping for v5e's 4x128^2 MXUs)."""
    if B >= 512:
        return 256
    return 128


def make_actor_forward(prep, *, batch_tile=None, return_padded=False):
    """Returns a jitted fn: x (B, state_size) f32 -> (B, action_size) f32
    (or the raw (B, 128) bf16 slab when return_padded=True)."""
    S = prep["state_size"]
    P = prep["pad"]
    A = prep["action_size"]
    tanh_dtype = _tanh_dtype()
    kernel = functools.partial(actor_kernel, tanh_dtype=tanh_dtype)

    def fwd(x):
        B, Sx = x.shape
        assert Sx == S
        TB = batch_tile if batch_tile is not None else _choose_batch_tile(B)
        n_tiles = pl.cdiv(B, TB)

        out = pl.pallas_call(
            kernel,
            out_shape=jax.ShapeDtypeStruct((B, P), jnp.bfloat16),
            grid=(n_tiles,),
            in_specs=[
                pl.BlockSpec((TB, S), lambda i: (i, 0)),   # x tile (batch rows)
                pl.BlockSpec((S, P),  lambda i: (0, 0)),   # w1  (VMEM-resident)
                pl.BlockSpec((1, P),  lambda i: (0, 0)),   # b1
                pl.BlockSpec((P, P),  lambda i: (0, 0)),   # w2
                pl.BlockSpec((1, P),  lambda i: (0, 0)),   # b2
                pl.BlockSpec((P, P),  lambda i: (0, 0)),   # w3
                pl.BlockSpec((3, P),  lambda i: (0, 0)),   # [b3; range; low]
            ],
            out_specs=pl.BlockSpec((TB, P), lambda i: (i, 0)),
            compiler_params=pltpu.CompilerParams(
                dimension_semantics=("parallel",)),        # megacore on v7x
        )(x, prep["w1"], prep["b1"], prep["w2"], prep["b2"], prep["w3"],
          prep["b3s"])

        if return_padded:
            return out
        # Fused inside the same jit: slice the lane padding + cast back to f32.
        return out[:, :A].astype(jnp.float32)

    return jax.jit(fwd)


# -------------------------- parameter construction --------------------------

def fan_in_init(key, shape_out_in):
    """fan_in_init: uniform(-1/sqrt(fan_in), 1/sqrt(fan_in)).
    shape_out_in = (out_features, in_features); returns transposed weight."""
    out_f, in_f = shape_out_in
    v = 1.0 / np.sqrt(in_f)
    w = jax.random.uniform(key, (out_f, in_f), jnp.float32, -v, v)
    return w.T


def linear_bias_init(key, in_f, out_f):
    # torch.nn.Linear default bias init: uniform(-1/sqrt(fan_in), 1/sqrt(fan_in))
    v = 1.0 / np.sqrt(in_f)
    return jax.random.uniform(key, (1, out_f), jnp.float32, -v, v)


def make_actor_params(key, state_size, action_size, h1=8, h2=16, init_w=0.003):
    k = jax.random.split(key, 6)
    return {
        "w1": fan_in_init(k[0], (h1, state_size)),            # (state_size, h1)
        "b1": linear_bias_init(k[1], state_size, h1),          # (1, h1)
        "w2": fan_in_init(k[2], (h2, h1)),                     # (h1, h2)
        "b2": linear_bias_init(k[3], h1, h2),                  # (1, h2)
        "w3": jax.random.uniform(k[4], (action_size, h2), jnp.float32,
                                 -init_w, init_w).T,           # (h2, action_size)
        "b3": linear_bias_init(k[5], h2, action_size),         # (1, action_size)
    }


# ------------------------------ references ------------------------------

def actor_ref_f32(x, p, action_range, action_low):
    """Pure-f32 reference of the original module semantics."""
    h1 = jnp.maximum(x @ p["w1"] + p["b1"], 0.0)
    h2 = jnp.maximum(h1 @ p["w2"] + p["b2"], 0.0)
    a = jnp.tanh(h2 @ p["w3"] + p["b3"])
    return a * action_range + action_low


def actor_ref_prepared(x, prep, tanh_dtype):
    """Reference mirroring the kernel's casts (bf16 operands, bf16 output)."""
    cd = prep["compute_dtype"]
    A = prep["action_size"]
    xp = x.astype(cd)
    h1 = jnp.maximum(jnp.dot(xp, prep["w1"],
                             preferred_element_type=jnp.float32)
                     + prep["b1"], 0.0)
    h2 = jnp.maximum(jnp.dot(h1.astype(cd), prep["w2"],
                             preferred_element_type=jnp.float32)
                     + prep["b2"], 0.0)
    z = jnp.dot(h2.astype(cd), prep["w3"], preferred_element_type=jnp.float32)
    a = jnp.tanh((z + prep["b3s"][0:1, :]).astype(tanh_dtype)).astype(jnp.float32)
    out = (a * prep["b3s"][1:2, :] + prep["b3s"][2:3, :]).astype(jnp.bfloat16)
    return out[:, :A].astype(jnp.float32)


# ----------------------------------- main -----------------------------------

if __name__ == "__main__":
    key = jax.random.PRNGKey(0)
    k_param, k_x = jax.random.split(key)

    batch = 200                 # non-multiple of 128 -> partial last tile
    state_size = 12
    action_size = 6
    h_units_1, h_units_2 = 8, 16

    # Per-dimension action bounds (fixed module attributes in the torch code).
    action_low = jnp.array([[-2.0, -2.0, -1.0, -1.0, 0.0, 0.0]], jnp.float32)
    action_high = jnp.array([[2.0, 2.0, 1.0, 1.0, 1.0, 1.0]], jnp.float32)
    action_range = action_high - action_low

    params = make_actor_params(k_param, state_size, action_size,
                               h_units_1, h_units_2, init_w=0.003)
    prep = prepare_actor_params(params, action_range, action_low)

    x = jax.random.normal(k_x, (batch, state_size), dtype=jnp.float32)

    actor_forward = make_actor_forward(prep)
    out = actor_forward(x)
    out = jax.block_until_ready(out)

    # Near-exactness check against a reference using identical casts.
    ref_match = actor_ref_prepared(x, prep, _tanh_dtype())
    np.testing.assert_allclose(np.asarray(out), np.asarray(ref_match),
                               rtol=2e-2, atol=2e-2)
    # Semantic-fidelity check against the pure-f32 original module math.
    ref_f32 = actor_ref_f32(x, params, action_range, action_low)
    np.testing.assert_allclose(np.asarray(out), np.asarray(ref_f32),
                               rtol=0, atol=5e-2)

    print("KERNEL_OK")
</pallas_src>

<mosaic_0001>
module attributes {stable_mosaic.version = 11 : i64} {
  func.func @actor_kernel(%arg0: i32, %arg1: memref<128x12xf32, #tpu.memory_space<vmem>>, %arg2: memref<12x128xbf16, #tpu.memory_space<vmem>>, %arg3: memref<1x128xf32, #tpu.memory_space<vmem>>, %arg4: memref<128x128xbf16, #tpu.memory_space<vmem>>, %arg5: memref<1x128xf32, #tpu.memory_space<vmem>>, %arg6: memref<128x128xbf16, #tpu.memory_space<vmem>>, %arg7: memref<3x128xf32, #tpu.memory_space<vmem>>, %arg8: memref<128x128xbf16, #tpu.memory_space<vmem>>) attributes {dimension_semantics = [#tpu.dimension_semantics<parallel>], iteration_bounds = array<i64: 2>, scalar_prefetch = 0 : i64, scratch_operands = 0 : i64, tpu.core_type = #tpu.core_type<tc>, window_params = [{transform_indices = @transform_0, window_bounds = array<i64: 128, 12>}, {pipeline_mode = #tpu.pipeline_mode<synchronous>, transform_indices = @transform_1, window_bounds = array<i64: 12, 128>}, {pipeline_mode = #tpu.pipeline_mode<synchronous>, transform_indices = @transform_2, window_bounds = array<i64: 1, 128>}, {pipeline_mode = #tpu.pipeline_mode<synchronous>, transform_indices = @transform_3, window_bounds = array<i64: 128, 128>}, {pipeline_mode = #tpu.pipeline_mode<synchronous>, transform_indices = @transform_4, window_bounds = array<i64: 1, 128>}, {pipeline_mode = #tpu.pipeline_mode<synchronous>, transform_indices = @transform_5, window_bounds = array<i64: 128, 128>}, {pipeline_mode = #tpu.pipeline_mode<synchronous>, transform_indices = @transform_6, window_bounds = array<i64: 3, 128>}, {transform_indices = @transform_7, window_bounds = array<i64: 128, 128>}]} {
    %c0 = arith.constant 0 : index
    %c0_0 = arith.constant 0 : index
    %0 = vector.load %arg1[%c0, %c0_0] : memref<128x12xf32, #tpu.memory_space<vmem>>, vector<128x12xf32>
    %1 = arith.truncf %0 : vector<128x12xf32> to vector<128x12xbf16>
    %c0_1 = arith.constant 0 : index
    %c0_2 = arith.constant 0 : index
    %2 = vector.load %arg2[%c0_1, %c0_2] : memref<12x128xbf16, #tpu.memory_space<vmem>>, vector<12x128xbf16>
    %cst = arith.constant dense<0.000000e+00> : vector<128x128xf32>
    %3 = tpu.matmul %1, %2, %cst {dimension_numbers = #tpu.dot_dimension_numbers<[1], [0], [0], [1], [0, 0, 1, 1], [], []>} : vector<128x12xbf16>, vector<12x128xbf16>, vector<128x128xf32> -> vector<128x128xf32>
    %c0_3 = arith.constant 0 : index
    %c0_4 = arith.constant 0 : index
    %4 = vector.load %arg3[%c0_3, %c0_4] : memref<1x128xf32, #tpu.memory_space<vmem>>, vector<1x128xf32>
    %5 = vector.broadcast %4 : vector<1x128xf32> to vector<128x128xf32>
    %6 = arith.addf %3, %5 : vector<128x128xf32>
    %cst_5 = arith.constant 0.000000e+00 : f32
    %7 = vector.broadcast %cst_5 : f32 to vector<128x128xf32>
    %8 = arith.maximumf %6, %7 : vector<128x128xf32>
    %9 = arith.truncf %8 : vector<128x128xf32> to vector<128x128xbf16>
    %c0_6 = arith.constant 0 : index
    %c0_7 = arith.constant 0 : index
    %10 = vector.load %arg4[%c0_6, %c0_7] : memref<128x128xbf16, #tpu.memory_space<vmem>>, vector<128x128xbf16>
    %cst_8 = arith.constant dense<0.000000e+00> : vector<128x128xf32>
    %11 = tpu.matmul %9, %10, %cst_8 {dimension_numbers = #tpu.dot_dimension_numbers<[1], [0], [0], [1], [0, 0, 1, 1], [], []>} : vector<128x128xbf16>, vector<128x128xbf16>, vector<128x128xf32> -> vector<128x128xf32>
    %c0_9 = arith.constant 0 : index
    %c0_10 = arith.constant 0 : index
    %12 = vector.load %arg5[%c0_9, %c0_10] : memref<1x128xf32, #tpu.memory_space<vmem>>, vector<1x128xf32>
    %13 = vector.broadcast %12 : vector<1x128xf32> to vector<128x128xf32>
    %14 = arith.addf %11, %13 : vector<128x128xf32>
    %cst_11 = arith.constant 0.000000e+00 : f32
    %15 = vector.broadcast %cst_11 : f32 to vector<128x128xf32>
    %16 = arith.maximumf %14, %15 : vector<128x128xf32>
    %c0_12 = arith.constant 0 : index
    %c0_13 = arith.constant 0 : index
    %17 = vector.load %arg7[%c0_12, %c0_13] : memref<3x128xf32, #tpu.memory_space<vmem>>, vector<3x128xf32>
    %18 = arith.truncf %16 : vector<128x128xf32> to vector<128x128xbf16>
    %c0_14 = arith.constant 0 : index
    %c0_15 = arith.constant 0 : index
    %19 = vector.load %arg6[%c0_14, %c0_15] : memref<128x128xbf16, #tpu.memory_space<vmem>>, vector<128x128xbf16>
    %cst_16 = arith.constant dense<0.000000e+00> : vector<128x128xf32>
    %20 = tpu.matmul %18, %19, %cst_16 {dimension_numbers = #tpu.dot_dimension_numbers<[1], [0], [0], [1], [0, 0, 1, 1], [], []>} : vector<128x128xbf16>, vector<128x128xbf16>, vector<128x128xf32> -> vector<128x128xf32>
    %21 = vector.extract_strided_slice %17 {offsets = [0, 0], sizes = [1, 128], strides = [1, 1]} : vector<3x128xf32> to vector<1x128xf32>
    %22 = vector.broadcast %21 : vector<1x128xf32> to vector<128x128xf32>
    %23 = arith.addf %20, %22 : vector<128x128xf32>
    %24 = math.tanh %23 : vector<128x128xf32>
    %25 = vector.extract_strided_slice %17 {offsets = [1, 0], sizes = [1, 128], strides = [1, 1]} : vector<3x128xf32> to vector<1x128xf32>
    %26 = vector.broadcast %25 : vector<1x128xf32> to vector<128x128xf32>
    %27 = arith.mulf %24, %26 : vector<128x128xf32>
    %28 = vector.extract_strided_slice %17 {offsets = [2, 0], sizes = [1, 128], strides = [1, 1]} : vector<3x128xf32> to vector<1x128xf32>
    %29 = vector.broadcast %28 : vector<1x128xf32> to vector<128x128xf32>
    %30 = arith.addf %27, %29 : vector<128x128xf32>
    %31 = arith.truncf %30 : vector<128x128xf32> to vector<128x128xbf16>
    %c0_17 = arith.constant 0 : index
    %c0_18 = arith.constant 0 : index
    %32 = vector.load %arg8[%c0_17, %c0_18] : memref<128x128xbf16, #tpu.memory_space<vmem>>, vector<128x128xbf16>
    tpu.vector_store %arg8[%c0_17, %c0_18], %31 {strides = array<i32>} : memref<128x128xbf16, #tpu.memory_space<vmem>>, vector<128x128xbf16>,
    return
  }
  func.func @transform_0(%arg0: i32) -> (i32, i32) {
    %c0_i32 = arith.constant 0 : i32
    %c0_i32_0 = arith.constant 0 : i32
    return %arg0, %c0_i32 : i32, i32
  }
  func.func @transform_1(%arg0: i32) -> (i32, i32) {
    %c0_i32 = arith.constant 0 : i32
    %c0_i32_0 = arith.constant 0 : i32
    %c0_i32_1 = arith.constant 0 : i32
    return %c0_i32, %c0_i32_0 : i32, i32
  }
  func.func @transform_2(%arg0: i32) -> (i32, i32) {
    %c0_i32 = arith.constant 0 : i32
    %c0_i32_0 = arith.constant 0 : i32
    %c0_i32_1 = arith.constant 0 : i32
    return %c0_i32, %c0_i32_0 : i32, i32
  }
  func.func @transform_3(%arg0: i32) -> (i32, i32) {
    %c0_i32 = arith.constant 0 : i32
    %c0_i32_0 = arith.constant 0 : i32
    %c0_i32_1 = arith.constant 0 : i32
    return %c0_i32, %c0_i32_0 : i32, i32
  }
  func.func @transform_4(%arg0: i32) -> (i32, i32) {
    %c0_i32 = arith.constant 0 : i32
    %c0_i32_0 = arith.constant 0 : i32
    %c0_i32_1 = arith.constant 0 : i32
    return %c0_i32, %c0_i32_0 : i32, i32
  }
  func.func @transform_5(%arg0: i32) -> (i32, i32) {
    %c0_i32 = arith.constant 0 : i32
    %c0_i32_0 = arith.constant 0 : i32
    %c0_i32_1 = arith.constant 0 : i32
    return %c0_i32, %c0_i32_0 : i32, i32
  }
  func.func @transform_6(%arg0: i32) -> (i32, i32) {
    %c0_i32 = arith.constant 0 : i32
    %c0_i32_0 = arith.constant 0 : i32
    %c0_i32_1 = arith.constant 0 : i32
    return %c0_i32, %c0_i32_0 : i32, i32
  }
  func.func @transform_7(%arg0: i32) -> (i32, i32) {
    %c0_i32 = arith.constant 0 : i32
    %c0_i32_0 = arith.constant 0 : i32
    return %arg0, %c0_i32 : i32, i32
  }
}

</mosaic_0001>

<llo_original>
// kernel: fwd.1
$region0: #{fwd.1}
  #allocation0 [shape = 'u32[]', space=smem, size = 0x4, offset = 0x4, fixed_abs, tag = 'smem constant byte address 0x4 - core index']
  #allocation1 [shape = 'u32[144,128]{1,0:T(1,128)}', space=vmem, size = 0x12000, scoped, tag = 'internal scratch']
  %s0 = inlined_call_operand.vmem [shape: f32[200,12], index: 0, kind: input, shape index: {}]
  %s1 = inlined_call_operand.vmem [shape: bf16[12,128], index: 1, kind: input, shape index: {}]
  %s2 = inlined_call_operand.vmem [shape: f32[1,128], index: 2, kind: input, shape index: {}]
  %s3 = inlined_call_operand.vmem [shape: bf16[128,128], index: 3, kind: input, shape index: {}]
  %s4 = inlined_call_operand.vmem [shape: f32[1,128], index: 4, kind: input, shape index: {}]
  %s5 = inlined_call_operand.vmem [shape: bf16[128,128], index: 5, kind: input, shape index: {}]
  %s6 = inlined_call_operand.vmem [shape: f32[3,128], index: 6, kind: input, shape index: {}]
  %s7 = inlined_call_operand.vmem [shape: bf16[200,128], index: 7, kind: output, shape index: {}]
  %s8 = sld [smem:[#allocation0]]
  $region105: #{fwd.1} parent=0
    _
  %s10 = ssub.s32 1, %s8
  %s11 = scalar_select 0, %s10, %s8
  $region1: #{fwd.1} parent=0
    #allocation2 [shape = 'u8[65536]{0}', space=vmem, size = 0x10000, scoped, tag = 'output window, operand 0']
    loop: start=0, step=1, limit=4
    $region2: #{fwd.1} parent=1 // loop_pre_header
      _
    $region3: #{fwd.1} parent=1 // loop_header
      %s13 = sphi 0, %s17
      %p14 = scmp.ge.s32.totalorder %s13, 4
      %s23 = sphi 0, %s25
      %s26 = sphi 0, %s23
      %s27 = sphi 0, %s26
      %s43 = sphi 0, %s27
      %s47 = sphi 0, %s47
      %s49 = sphi 0, %s47
      %s50 = sphi 0, %s49
      %s64 = sphi 0, %s50
      %s68 = sphi 0, %s68
      %s70 = sphi 0, %s68
      %s71 = sphi 0, %s70
      %s85 = sphi 0, %s71
      %s89 = sphi 0, %s89
      %s91 = sphi 0, %s89
      %s92 = sphi 0, %s91
      %s106 = sphi 0, %s92
      %s110 = sphi 0, %s110
      %s112 = sphi 0, %s110
      %s113 = sphi 0, %s112
      %s127 = sphi 0, %s113
      %s131 = sphi 0, %s131
      %s133 = sphi 0, %s131
      %s134 = sphi 0, %s133
      %s148 = sphi 0, %s134
      %s152 = sphi 0, %s152
      %s154 = sphi 0, %s152
      %s155 = sphi 0, %s154
      %s169 = sphi 0, %s155
      %s175 = sphi 0, %s177
      %s178 = sphi 0, %s175
      %s179 = sphi 0, %s178
      %s195 = sphi 0, %s179
    $region4: #{fwd.1} parent=1 // loop_header_branch
      %16 = sbr.rel (%p14) target = $region8
    $region5: #{fwd.1} parent=1 // loop_body
      %s18 = ssub.s32 %s13, 1
      %s19 = ssub.s32 %s13, 2
      %s20 = sadd.s32 %s13, 1
      %s21 = ssub.s32 %s13, %s20
      %p22 = scmp.eq.s32.totalorder %s21, 0
      %s24 = sadd.s32 %s23, 1
      %s25 = scalar_select %p22, %s23, %s24
      %p28 = pneg %p22
      %p29 = scmp.eq.s32.totalorder %s13, 1
      %p30 = por %p28, %p29
      %p31 = scmp.ne.s32.totalorder %s23, %s26
      %p32 = scmp.eq.s32.totalorder %s13, 0
      %p33 = por %p31, %p32
      %p34 = scmp.ne.s32.totalorder %s23, %s26
      %p35 = scmp.eq.s32.totalorder %s18, 1
      %p36 = por %p34, %p35
      %p37 = scmp.ne.s32.totalorder %s26, %s27
      %p38 = scmp.eq.s32.totalorder %s18, 0
      %p39 = por %p37, %p38
      %p40 = scmp.ne.s32.totalorder %s26, %s27
      %p41 = scmp.eq.s32.totalorder %s19, 1
      %p42 = por %p40, %p41
      %p44 = scmp.ne.s32.totalorder %s27, %s43
      %p45 = scmp.eq.s32.totalorder %s19, 0
      %p46 = por %p44, %p45
      %s48 = sadd.s32 %s47, 1
      %p51 = scmp.eq.s32.totalorder %s13, 1
      %p52 = scmp.ne.s32.totalorder %s47, %s49
      %p53 = scmp.eq.s32.totalorder %s13, 0
      %p54 = por %p52, %p53
      %p55 = scmp.ne.s32.totalorder %s47, %s49
      %p56 = scmp.eq.s32.totalorder %s18, 1
      %p57 = por %p55, %p56
      %p58 = scmp.ne.s32.totalorder %s49, %s50
      %p59 = scmp.eq.s32.totalorder %s18, 0
      %p60 = por %p58, %p59
      %p61 = scmp.ne.s32.totalorder %s49, %s50
      %p62 = scmp.eq.s32.totalorder %s19, 1
      %p63 = por %p61, %p62
      %p65 = scmp.ne.s32.totalorder %s50, %s64
      %p66 = scmp.eq.s32.totalorder %s19, 0
      %p67 = por %p65, %p66
      %s69 = sadd.s32 %s68, 1
      %p72 = scmp.eq.s32.totalorder %s13, 1
      %p73 = scmp.ne.s32.totalorder %s68, %s70
      %p74 = scmp.eq.s32.totalorder %s13, 0
      %p75 = por %p73, %p74
      %p76 = scmp.ne.s32.totalorder %s68, %s70
      %p77 = scmp.eq.s32.totalorder %s18, 1
      %p78 = por %p76, %p77
      %p79 = scmp.ne.s32.totalorder %s70, %s71
      %p80 = scmp.eq.s32.totalorder %s18, 0
      %p81 = por %p79, %p80
      %p82 = scmp.ne.s32.totalorder %s70, %s71
      %p83 = scmp.eq.s32.totalorder %s19, 1
      %p84 = por %p82, %p83
      %p86 = scmp.ne.s32.totalorder %s71, %s85
      %p87 = scmp.eq.s32.totalorder %s19, 0
      %p88 = por %p86, %p87
      %s90 = sadd.s32 %s89, 1
      %p93 = scmp.eq.s32.totalorder %s13, 1
      %p94 = scmp.ne.s32.totalorder %s89, %s91
      %p95 = scmp.eq.s32.totalorder %s13, 0
      %p96 = por %p94, %p95
      %p97 = scmp.ne.s32.totalorder %s89, %s91
      %p98 = scmp.eq.s32.totalorder %s18, 1
      %p99 = por %p97, %p98
      %p100 = scmp.ne.s32.totalorder %s91, %s92
      %p101 = scmp.eq.s32.totalorder %s18, 0
      %p102 = por %p100, %p101
      %p103 = scmp.ne.s32.totalorder %s91, %s92
      %p104 = scmp.eq.s32.totalorder %s19, 1
      %p105 = por %p103, %p104
      %p107 = scmp.ne.s32.totalorder %s92, %s106
      %p108 = scmp.eq.s32.totalorder %s19, 0
      %p109 = por %p107, %p108
      %s111 = sadd.s32 %s110, 1
      %p114 = scmp.eq.s32.totalorder %s13, 1
      %p115 = scmp.ne.s32.totalorder %s110, %s112
      %p116 = scmp.eq.s32.totalorder %s13, 0
      %p117 = por %p115, %p116
      %p118 = scmp.ne.s32.totalorder %s110, %s112
      %p119 = scmp.eq.s32.totalorder %s18, 1
      %p120 = por %p118, %p119
      %p121 = scmp.ne.s32.totalorder %s112, %s113
      %p122 = scmp.eq.s32.totalorder %s18, 0
      %p123 = por %p121, %p122
      %p124 = scmp.ne.s32.totalorder %s112, %s113
      %p125 = scmp.eq.s32.totalorder %s19, 1
      %p126 = por %p124, %p125
      %p128 = scmp.ne.s32.totalorder %s113, %s127
      %p129 = scmp.eq.s32.totalorder %s19, 0
      %p130 = por %p128, %p129
      %s132 = sadd.s32 %s131, 1
      %p135 = scmp.eq.s32.totalorder %s13, 1
      %p136 = scmp.ne.s32.totalorder %s131, %s133
      %p137 = scmp.eq.s32.totalorder %s13, 0
      %p138 = por %p136, %p137
      %p139 = scmp.ne.s32.totalorder %s131, %s133
      %p140 = scmp.eq.s32.totalorder %s18, 1
      %p141 = por %p139, %p140
      %p142 = scmp.ne.s32.totalorder %s133, %s134
      %p143 = scmp.eq.s32.totalorder %s18, 0
      %p144 = por %p142, %p143
      %p145 = scmp.ne.s32.totalorder %s133, %s134
      %p146 = scmp.eq.s32.totalorder %s19, 1
      %p147 = por %p145, %p146
      %p149 = scmp.ne.s32.totalorder %s134, %s148
      %p150 = scmp.eq.s32.totalorder %s19, 0
      %p151 = por %p149, %p150
      %s153 = sadd.s32 %s152, 1
      %p156 = scmp.eq.s32.totalorder %s13, 1
      %p157 = scmp.ne.s32.totalorder %s152, %s154
      %p158 = scmp.eq.s32.totalorder %s13, 0
      %p159 = por %p157, %p158
      %p160 = scmp.ne.s32.totalorder %s152, %s154
      %p161 = scmp.eq.s32.totalorder %s18, 1
      %p162 = por %p160, %p161
      %p163 = scmp.ne.s32.totalorder %s154, %s155
      %p164 = scmp.eq.s32.totalorder %s18, 0
      %p165 = por %p163, %p164
      %p166 = scmp.ne.s32.totalorder %s154, %s155
      %p167 = scmp.eq.s32.totalorder %s19, 1
      %p168 = por %p166, %p167
      %p170 = scmp.ne.s32.totalorder %s155, %s169
      %p171 = scmp.eq.s32.totalorder %s19, 0
      %p172 = por %p170, %p171
      %s173 = ssub.s32 %s13, %s20
      %p174 = scmp.eq.s32.totalorder %s173, 0
      %s176 = sadd.s32 %s175, 1
      %s177 = scalar_select %p174, %s175, %s176
      %p180 = pneg %p174
      %p181 = scmp.eq.s32.totalorder %s13, 1
      %p182 = por %p180, %p181
      %p183 = scmp.ne.s32.totalorder %s175, %s178
      %p184 = scmp.eq.s32.totalorder %s13, 0
      %p185 = por %p183, %p184
      %p186 = scmp.ne.s32.totalorder %s175, %s178
      %p187 = scmp.eq.s32.totalorder %s18, 1
      %p188 = por %p186, %p187
      %p189 = scmp.ne.s32.totalorder %s178, %s179
      %p190 = scmp.eq.s32.totalorder %s18, 0
      %p191 = por %p189, %p190
      %p192 = scmp.ne.s32.totalorder %s178, %s179
      %p193 = scmp.eq.s32.totalorder %s19, 1
      %p194 = por %p192, %p193
      %p196 = scmp.ne.s32.totalorder %s179, %s195
      %p197 = scmp.eq.s32.totalorder %s19, 0
      %p198 = por %p196, %p197
      %p199 = scmp.le.s32.totalorder 1, %s13
      %p200 = scmp.lt.s32.totalorder %s13, 3
      %p201 = pnand %p199, %p200
      %p202 = pneg %p201
      // Predicated region
      $region9: #{fwd.1} parent=5 // pred_check
        _
      $region10: #{fwd.1} parent=5 // pred_check_branch
        %204 = sbr.rel (%p201) target = $region12
      $region11: #{fwd.1} parent=5 // pred_region
        %s205 = ssub.s32 %s13, 1
        // Predicated region
        $region13: #{fwd.1} parent=11 // pred_check
          %p206 = pneg %p60
        $region14: #{fwd.1} parent=11 // pred_check_branch
          %208 = sbr.rel (%p206) target = $region16
        $region15: #{fwd.1} parent=11 // pred_region
          _
        $region16: #{fwd.1} parent=11 // pred_fallthru
          _
        // Predicated region
        $region17: #{fwd.1} parent=11 // pred_check
          %p209 = pneg %p81
        $region18: #{fwd.1} parent=11 // pred_check_branch
          %211 = sbr.rel (%p209) target = $region20
        $region19: #{fwd.1} parent=11 // pred_region
          _
        $region20: #{fwd.1} parent=11 // pred_fallthru
          _
        // Predicated region
        $region21: #{fwd.1} parent=11 // pred_check
          %p212 = pneg %p102
        $region22: #{fwd.1} parent=11 // pred_check_branch
          %214 = sbr.rel (%p212) target = $region24
        $region23: #{fwd.1} parent=11 // pred_region
          _
        $region24: #{fwd.1} parent=11 // pred_fallthru
          _
        // Predicated region
        $region25: #{fwd.1} parent=11 // pred_check
          %p215 = pneg %p123
        $region26: #{fwd.1} parent=11 // pred_check_branch
          %217 = sbr.rel (%p215) target = $region28
        $region27: #{fwd.1} parent=11 // pred_region
          _
        $region28: #{fwd.1} parent=11 // pred_fallthru
          _
        // Predicated region
        $region29: #{fwd.1} parent=11 // pred_check
          %p218 = pneg %p144
        $region30: #{fwd.1} parent=11 // pred_check_branch
          %220 = sbr.rel (%p218) target = $region32
        $region31: #{fwd.1} parent=11 // pred_region
          _
        $region32: #{fwd.1} parent=11 // pred_fallthru
          _
        // Predicated region
        $region33: #{fwd.1} parent=11 // pred_check
          %p221 = pneg %p165
        $region34: #{fwd.1} parent=11 // pred_check_branch
          %223 = sbr.rel (%p221) target = $region36
        $region35: #{fwd.1} parent=11 // pred_region
          _
        $region36: #{fwd.1} parent=11 // pred_fallthru
          _
      $region12: #{fwd.1} parent=5 // pred_fallthru
        _
      %p224 = scmp.lt.s32.totalorder %s13, 2
      // Predicated region
      $region37: #{fwd.1} parent=5 // pred_check
        %p225 = pneg %p224
      $region38: #{fwd.1} parent=5 // pred_check_branch
        %227 = sbr.rel (%p225) target = $region40
      $region39: #{fwd.1} parent=5 // pred_region
        // Predicated region
        $region41: #{fwd.1} parent=39 // pred_check
          %p228 = pneg %p33
        $region42: #{fwd.1} parent=39 // pred_check_branch
          %230 = sbr.rel (%p228) target = $region44
        $region43: #{fwd.1} parent=39 // pred_region
          %s231 = smul.u32 16, %s13
          %s232 = ssub.s32 25, %s231
          %p233 = scmp.lt.s32.totalorder %s232, 16
          %s234 = scalar_select %p233, %s232, 16
          %s235 = smul.u32 128, %s234
          %p236 = scmp.lt.s32.totalorder %s231, 24
          %s237 = scalar_select %p236, %s231, 24
          %s238 = smul.addr %s237, 8
          %s239 = scalar_lea.vmem %s0, %s238
          %s240 = smul.u32 16, %s13
          %s241 = ssub.s32 25, %s240
          %p242 = scmp.lt.s32.totalorder %s241, 16
          %s243 = scalar_select %p242, %s241, 16
          %s244 = smul.u32 128, %s243
        $region44: #{fwd.1} parent=39 // pred_fallthru
          _
      $region40: #{fwd.1} parent=5 // pred_fallthru
        _
      %p245 = scmp.le.s32.totalorder 1, %s13
      %p246 = scmp.lt.s32.totalorder %s13, 3
      %p247 = pnand %p245, %p246
      %p248 = pneg %p247
      // Predicated region
      $region45: #{fwd.1} parent=5 // pred_check
        _
      $region46: #{fwd.1} parent=5 // pred_check_branch
        %250 = sbr.rel (%p247) target = $region48
      $region47: #{fwd.1} parent=5 // pred_region
        %s251 = ssub.s32 %s13, 1
        %s252 = smul.u32 16, %s18
        %s253 = ssub.s32 25, %s252
        %p254 = scmp.lt.s32.totalorder %s253, 16
        %s255 = scalar_select %p254, %s253, 16
        %s256 = smul.u32 128, %s255
        %p257 = scmp.lt.s32.totalorder %s252, 24
        %s258 = scalar_select %p257, %s252, 24
        %s259 = smul.addr %s258, 8
        %s260 = scalar_lea.vmem %s0, %s259
        %p261 = pneg %p39
        %p262 = pneg %p36
        %p263 = pneg %p60
        %p264 = pneg %p57
        %p265 = pneg %p81
        %p266 = pneg %p78
        %p267 = pneg %p102
        %p268 = pneg %p99
        %p269 = pneg %p123
        %p270 = pneg %p120
        %p271 = pneg %p144
        %p272 = pneg %p141
        %p273 = pneg %p165
        %p274 = pneg %p162
        %p275 = pneg %p191
        %p276 = pneg %p188
        %s277 = sand.u32 %s178, 1
        %s278 = sand.u32 %s178, 1
        %s279 = smul.addr %s278, 64
        %s280 = scalar_lea.vmem [#allocation2], %s279
        %s281 = smul.u32 16, %s18
        %s282 = ssub.s32 25, %s281
        %p283 = scmp.lt.s32.totalorder %s282, 16
        %s284 = scalar_select %p283, %s282, 16
        %s285 = smul.u32 128, %s284
        %p286 = scmp.lt.s32.totalorder %s281, 24
        %s287 = scalar_select %p286, %s281, 24
        %s288 = smul.addr %s287, 8
        %s289 = scalar_lea.vmem %s0, %s288
        %s290 = smul.u32 16, %s18
        %s291 = ssub.s32 25, %s290
        %p292 = scmp.lt.s32.totalorder %s291, 16
        %s293 = scalar_select %p292, %s291, 16
        %s294 = smul.u32 128, %s293
        %s295 = smul.u32 16, %s18
        %s296 = ssub.s32 25, %s295
        %p297 = scmp.lt.s32.totalorder %s296, 16
        %s298 = scalar_select %p297, %s296, 16
        %s299 = smul.u32 64, %s298
        %v301 = vld [vmem:[%s289] sm:$0xff]
        %v302 = vld [vmem:[%s289 + $0x8] sm:$0xff]
        %v303 = vld [vmem:[%s289 + $0x10] sm:$0xff]
        %v304 = vld [vmem:[%s289 + $0x18] sm:$0xff]
        %v305 = vld [vmem:[%s289 + $0x20] sm:$0xff]
        %v306 = vld [vmem:[%s289 + $0x28] sm:$0xff]
        %v307 = vld [vmem:[%s289 + $0x30] sm:$0xff]
        %v308 = vld [vmem:[%s289 + $0x38] sm:$0xff]
        %v309 = vld [vmem:[%s289 + $0x40] sm:$0xff]
        %v310 = vld [vmem:[%s289 + $0x48] sm:$0xff]
        %v311 = vld [vmem:[%s289 + $0x50] sm:$0xff]
        %v312 = vld [vmem:[%s289 + $0x58] sm:$0xff]
        %v313 = vld [vmem:[%s289 + $0x60] sm:$0xff]
        %v314 = vld [vmem:[%s289 + $0x68] sm:$0xff]
        %v315 = vld [vmem:[%s289 + $0x70] sm:$0xff]
        %v316 = vld [vmem:[%s289 + $0x78] sm:$0xff]
        %v317 = vpack.c.bf16 %v302, %v301
        %v318 = vpack.c.bf16 %v304, %v303
        %v319 = vpack.c.bf16 %v306, %v305
        %v320 = vpack.c.bf16 %v308, %v307
        %v321 = vpack.c.bf16 %v310, %v309
        %v322 = vpack.c.bf16 %v312, %v311
        %v323 = vpack.c.bf16 %v314, %v313
        %v324 = vpack.c.bf16 %v316, %v315
        %v325 = vld [vmem:[%s1] sm:$0xf]
        %v326 = vld [vmem:[%s1 + $0x4] sm:$0x3]
        %v327 = vld [vmem:[%s2] sm:$0x1]
        %v329 = vlaneseq
        %v330 = vshrl.u32 %v329, 7
        %v331 = vsub.s32 0, %v330
        %v332 = vrot.slane %v327, %v331
        %v336 = vunpack.c.l.b16 %v325
        %v337 = vunpack.c.l.b16 %v326
        %v338 = vpack.c.b16 %v337, %v336
        %vm339 = vcmask 97280
        %v341 = vsel %vm339, %v317, 0
        %v344 = vsel %vm339, %v318, 0
        %v347 = vsel %vm339, %v319, 0
        %v350 = vsel %vm339, %v320, 0
        %v353 = vsel %vm339, %v321, 0
        %v356 = vsel %vm339, %v322, 0
        %v359 = vsel %vm339, %v323, 0
        %v362 = vsel %vm339, %v324, 0
        %vm364 = vcmask 1045504
        %v366 = vsel %vm364, %v338, 0
        %368 = vmatprep.subr.bf16.mxu0 0
        %369 = vmatpush1.bf16.msra.mxu0 %v366
        %370 = vmatprep.subr.bf16.mxu0 0
        %371 = vmatpush1.bf16.msra.mxu0 0
        %372 = vmatprep.subr.bf16.mxu0 0
        %373 = vmatpush1.bf16.msra.mxu0 0
        %374 = vmatprep.subr.bf16.mxu0 0
        %375 = vmatpush1.bf16.msra.mxu0 0
        %376 = vmatprep.subr.bf16.mxu0 0
        %377 = vmatpush1.bf16.msra.mxu0 0
        %378 = vmatprep.subr.bf16.mxu0 0
        %379 = vmatpush1.bf16.msra.mxu0 0
        %380 = vmatprep.subr.bf16.mxu0 0
        %381 = vmatpush1.bf16.msra.mxu0 0
        %382 = vmatprep.subr.bf16.mxu0 0
        %383 = vmatpush1.bf16.msra.mxu0 0
        %384 = vmatprep.subr.bf16.mxu0 0
        %385 = vmatpush1.bf16.msra.mxu0 0
        %386 = vmatprep.subr.bf16.mxu0 0
        %387 = vmatpush1.bf16.msra.mxu0 0
        %388 = vmatprep.subr.bf16.mxu0 0
        %389 = vmatpush1.bf16.msra.mxu0 0
        %390 = vmatprep.subr.bf16.mxu0 0
        %391 = vmatpush1.bf16.msra.mxu0 0
        %392 = vmatprep.subr.bf16.mxu0 0
        %393 = vmatpush1.bf16.msra.mxu0 0
        %394 = vmatprep.subr.bf16.mxu0 0
        %395 = vmatpush1.bf16.msra.mxu0 0
        %396 = vmatprep.subr.bf16.mxu0 0
        %397 = vmatpush1.bf16.msra.mxu0 0
        %398 = vmatprep.subr.bf16.mxu0 0
        %399 = vmatpush1.bf16.msra.mxu0 0
        %400 = vmatprep.mubr.bf16.mxu0 0
        %401 = vmatmul.mubr.bf16.gmra.mrb[0].mxu0 %v341
        %v402 = vpop.f32.mrb[0].mxu0
        %v403 = vadd.f32 %v332, %v402
        %v404 = vpop.f32.mrb[0].mxu0
        %v405 = vpop.f32.mrb[0].mxu0
        %v406 = vadd.f32 %v332, %v405
        %v407 = vpop.f32.mrb[0].mxu0
        %408 = vmatprep.mubr.bf16.mxu0 0
        %409 = vmatmul.mubr.bf16.gmra.mrb[0].mxu0 %v344
        %v410 = vpop.f32.mrb[0].mxu0
        %v411 = vadd.f32 %v332, %v410
        %v412 = vpop.f32.mrb[0].mxu0
        %v413 = vpop.f32.mrb[0].mxu0
        %v414 = vadd.f32 %v332, %v413
        %v415 = vpop.f32.mrb[0].mxu0
        %416 = vmatprep.mubr.bf16.mxu0 0
        %417 = vmatmul.mubr.bf16.gmra.mrb[0].mxu0 %v347
        %v418 = vpop.f32.mrb[0].mxu0
        %v419 = vadd.f32 %v332, %v418
        %v420 = vpop.f32.mrb[0].mxu0
        %v421 = vpop.f32.mrb[0].mxu0
        %v422 = vadd.f32 %v332, %v421
        %v423 = vpop.f32.mrb[0].mxu0
        %424 = vmatprep.mubr.bf16.mxu0 0
        %425 = vmatmul.mubr.bf16.gmra.mrb[0].mxu0 %v350
        %v426 = vpop.f32.mrb[0].mxu0
        %v427 = vadd.f32 %v332, %v426
        %v428 = vpop.f32.mrb[0].mxu0
        %v429 = vpop.f32.mrb[0].mxu0
        %v430 = vadd.f32 %v332, %v429
        %v431 = vpop.f32.mrb[0].mxu0
        %432 = vmatprep.mubr.bf16.mxu0 0
        %433 = vmatmul.mubr.bf16.gmra.mrb[0].mxu0 %v353
        %v434 = vpop.f32.mrb[0].mxu0
        %v435 = vadd.f32 %v332, %v434
        %v436 = vpop.f32.mrb[0].mxu0
        %v437 = vpop.f32.mrb[0].mxu0
        %v438 = vadd.f32 %v332, %v437
        %v439 = vpop.f32.mrb[0].mxu0
        %440 = vmatprep.mubr.bf16.mxu0 0
        %441 = vmatmul.mubr.bf16.gmra.mrb[0].mxu0 %v356
        %v442 = vpop.f32.mrb[0].mxu0
        %v443 = vadd.f32 %v332, %v442
        %v444 = vpop.f32.mrb[0].mxu0
        %v445 = vpop.f32.mrb[0].mxu0
        %v446 = vadd.f32 %v332, %v445
        %v447 = vpop.f32.mrb[0].mxu0
        %448 = vmatprep.mubr.bf16.mxu0 0
        %449 = vmatmul.mubr.bf16.gmra.mrb[0].mxu0 %v359
        %v450 = vpop.f32.mrb[0].mxu0
        %v451 = vadd.f32 %v332, %v450
        %v452 = vpop.f32.mrb[0].mxu0
        %v453 = vpop.f32.mrb[0].mxu0
        %v454 = vadd.f32 %v332, %v453
        %v455 = vpop.f32.mrb[0].mxu0
        %456 = vmatprep.mubr.bf16.mxu0 0
        %457 = vmatmul.mubr.bf16.gmra.mrb[0].mxu0 %v362
        %v458 = vpop.f32.mrb[0].mxu0
        %v459 = vadd.f32 %v332, %v458
        %v460 = vpop.f32.mrb[0].mxu0
        %v461 = vpop.f32.mrb[0].mxu0
        %v462 = vadd.f32 %v332, %v461
        %v463 = vpop.f32.mrb[0].mxu0
        %464 = vdwg.mxu0
        %v465 = vmax.f32 %v403, 0.0
        %v466 = vmax.f32 %v406, 0.0
        %v467 = vmax.f32 %v411, 0.0
        %v468 = vmax.f32 %v414, 0.0
        %v469 = vmax.f32 %v419, 0.0
        %v470 = vmax.f32 %v422, 0.0
        %v471 = vmax.f32 %v427, 0.0
        %v472 = vmax.f32 %v430, 0.0
        %v473 = vmax.f32 %v435, 0.0
        %v474 = vmax.f32 %v438, 0.0
        %v475 = vmax.f32 %v443, 0.0
        %v476 = vmax.f32 %v446, 0.0
        %v477 = vmax.f32 %v451, 0.0
        %v478 = vmax.f32 %v454, 0.0
        %v479 = vmax.f32 %v459, 0.0
        %v480 = vmax.f32 %v462, 0.0
        %v481 = vpack.c.bf16 %v466, %v465
        %v482 = vpack.c.bf16 %v468, %v467
        %v483 = vpack.c.bf16 %v470, %v469
        %v484 = vpack.c.bf16 %v472, %v471
        %v485 = vpack.c.bf16 %v474, %v473
        %v486 = vpack.c.bf16 %v476, %v475
        %v487 = vpack.c.bf16 %v478, %v477
        %v488 = vpack.c.bf16 %v480, %v479
        %v489 = vld [vmem:[%s3] sm:$0xf]
        %v490 = vld [vmem:[%s3 + $0x4] sm:$0xf]
        %v491 = vld [vmem:[%s3 + $0x8] sm:$0xf]
        %v492 = vld [vmem:[%s3 + $0xc] sm:$0xf]
        %v493 = vld [vmem:[%s3 + $0x10] sm:$0xf]
        %v494 = vld [vmem:[%s3 + $0x14] sm:$0xf]
        %v495 = vld [vmem:[%s3 + $0x18] sm:$0xf]
        %v496 = vld [vmem:[%s3 + $0x1c] sm:$0xf]
        %v497 = vld [vmem:[%s3 + $0x20] sm:$0xf]
        %v498 = vld [vmem:[%s3 + $0x24] sm:$0xf]
        %v499 = vld [vmem:[%s3 + $0x28] sm:$0xf]
        %v500 = vld [vmem:[%s3 + $0x2c] sm:$0xf]
        %v501 = vld [vmem:[%s3 + $0x30] sm:$0xf]
        %v502 = vld [vmem:[%s3 + $0x34] sm:$0xf]
        %v503 = vld [vmem:[%s3 + $0x38] sm:$0xf]
        %v504 = vld [vmem:[%s3 + $0x3c] sm:$0xf]
        %v505 = vld [vmem:[%s4] sm:$0x1]
        %v507 = vlaneseq
        %v508 = vshrl.u32 %v507, 7
        %v509 = vsub.s32 0, %v508
        %v510 = vrot.slane %v505, %v509
        %v528 = vunpack.c.l.b16 %v489
        %v529 = vunpack.c.l.b16 %v490
        %v530 = vunpack.c.l.b16 %v491
        %v531 = vunpack.c.l.b16 %v492
        %v532 = vunpack.c.l.b16 %v493
        %v533 = vunpack.c.l.b16 %v494
        %v534 = vunpack.c.l.b16 %v495
        %v535 = vunpack.c.l.b16 %v496
        %v536 = vunpack.c.l.b16 %v497
        %v537 = vunpack.c.l.b16 %v498
        %v538 = vunpack.c.l.b16 %v499
        %v539 = vunpack.c.l.b16 %v500
        %v540 = vunpack.c.l.b16 %v501
        %v541 = vunpack.c.l.b16 %v502
        %v542 = vunpack.c.l.b16 %v503
        %v543 = vunpack.c.l.b16 %v504
        %v544 = vpack.c.b16 %v529, %v528
        %v545 = vpack.c.b16 %v531, %v530
        %v546 = vpack.c.b16 %v533, %v532
        %v547 = vpack.c.b16 %v535, %v534
        %v548 = vpack.c.b16 %v537, %v536
        %v549 = vpack.c.b16 %v539, %v538
        %v550 = vpack.c.b16 %v541, %v540
        %v551 = vpack.c.b16 %v543, %v542
        %560 = vmatprep.subr.bf16.mxu0 0
        %561 = vmatpush1.bf16.msra.mxu0 %v544
        %562 = vmatprep.subr.bf16.mxu0 0
        %563 = vmatpush1.bf16.msra.mxu0 %v545
        %564 = vmatprep.subr.bf16.mxu0 0
        %565 = vmatpush1.bf16.msra.mxu0 %v546
        %566 = vmatprep.subr.bf16.mxu0 0
        %567 = vmatpush1.bf16.msra.mxu0 %v547
        %568 = vmatprep.subr.bf16.mxu0 0
        %569 = vmatpush1.bf16.msra.mxu0 %v548
        %570 = vmatprep.subr.bf16.mxu0 0
        %571 = vmatpush1.bf16.msra.mxu0 %v549
        %572 = vmatprep.subr.bf16.mxu0 0
        %573 = vmatpush1.bf16.msra.mxu0 %v550
        %574 = vmatprep.subr.bf16.mxu0 0
        %575 = vmatpush1.bf16.msra.mxu0 %v551
        %576 = vmatprep.subr.bf16.mxu0 0
        %577 = vmatpush1.bf16.msra.mxu0 0
        %578 = vmatprep.subr.bf16.mxu0 0
        %579 = vmatpush1.bf16.msra.mxu0 0
        %580 = vmatprep.subr.bf16.mxu0 0
        %581 = vmatpush1.bf16.msra.mxu0 0
        %582 = vmatprep.subr.bf16.mxu0 0
        %583 = vmatpush1.bf16.msra.mxu0 0
        %584 = vmatprep.subr.bf16.mxu0 0
        %585 = vmatpush1.bf16.msra.mxu0 0
        %586 = vmatprep.subr.bf16.mxu0 0
        %587 = vmatpush1.bf16.msra.mxu0 0
        %588 = vmatprep.subr.bf16.mxu0 0
        %589 = vmatpush1.bf16.msra.mxu0 0
        %590 = vmatprep.subr.bf16.mxu0 0
        %591 = vmatpush1.bf16.msra.mxu0 0
        %592 = vmatprep.mubr.bf16.mxu0 0
        %593 = vmatmul.mubr.bf16.gmra.mrb[0].mxu0 %v481
        %v594 = vpop.f32.mrb[0].mxu0
        %v595 = vadd.f32 %v510, %v594
        %v596 = vpop.f32.mrb[0].mxu0
        %v597 = vpop.f32.mrb[0].mxu0
        %v598 = vadd.f32 %v510, %v597
        %v599 = vpop.f32.mrb[0].mxu0
        %600 = vmatprep.mubr.bf16.mxu0 0
        %601 = vmatmul.mubr.bf16.gmra.mrb[0].mxu0 %v482
        %v602 = vpop.f32.mrb[0].mxu0
        %v603 = vadd.f32 %v510, %v602
        %v604 = vpop.f32.mrb[0].mxu0
        %v605 = vpop.f32.mrb[0].mxu0
        %v606 = vadd.f32 %v510, %v605
        %v607 = vpop.f32.mrb[0].mxu0
        %608 = vmatprep.mubr.bf16.mxu0 0
        %609 = vmatmul.mubr.bf16.gmra.mrb[0].mxu0 %v483
        %v610 = vpop.f32.mrb[0].mxu0
        %v611 = vadd.f32 %v510, %v610
        %v612 = vpop.f32.mrb[0].mxu0
        %v613 = vpop.f32.mrb[0].mxu0
        %v614 = vadd.f32 %v510, %v613
        %v615 = vpop.f32.mrb[0].mxu0
        %616 = vmatprep.mubr.bf16.mxu0 0
        %617 = vmatmul.mubr.bf16.gmra.mrb[0].mxu0 %v484
        %v618 = vpop.f32.mrb[0].mxu0
        %v619 = vadd.f32 %v510, %v618
        %v620 = vpop.f32.mrb[0].mxu0
        %v621 = vpop.f32.mrb[0].mxu0
        %v622 = vadd.f32 %v510, %v621
        %v623 = vpop.f32.mrb[0].mxu0
        %624 = vmatprep.mubr.bf16.mxu0 0
        %625 = vmatmul.mubr.bf16.gmra.mrb[0].mxu0 %v485
        %v626 = vpop.f32.mrb[0].mxu0
        %v627 = vadd.f32 %v510, %v626
        %v628 = vpop.f32.mrb[0].mxu0
        %v629 = vpop.f32.mrb[0].mxu0
        %v630 = vadd.f32 %v510, %v629
        %v631 = vpop.f32.mrb[0].mxu0
        %632 = vmatprep.mubr.bf16.mxu0 0
        %633 = vmatmul.mubr.bf16.gmra.mrb[0].mxu0 %v486
        %v634 = vpop.f32.mrb[0].mxu0
        %v635 = vadd.f32 %v510, %v634
        %v636 = vpop.f32.mrb[0].mxu0
        %v637 = vpop.f32.mrb[0].mxu0
        %v638 = vadd.f32 %v510, %v637
        %v639 = vpop.f32.mrb[0].mxu0
        %640 = vmatprep.mubr.bf16.mxu0 0
        %641 = vmatmul.mubr.bf16.gmra.mrb[0].mxu0 %v487
        %v642 = vpop.f32.mrb[0].mxu0
        %v643 = vadd.f32 %v510, %v642
        %v644 = vpop.f32.mrb[0].mxu0
        %v645 = vpop.f32.mrb[0].mxu0
        %v646 = vadd.f32 %v510, %v645
        %v647 = vpop.f32.mrb[0].mxu0
        %648 = vmatprep.mubr.bf16.mxu0 0
        %649 = vmatmul.mubr.bf16.gmra.mrb[0].mxu0 %v488
        %v650 = vpop.f32.mrb[0].mxu0
        %v651 = vadd.f32 %v510, %v650
        %v652 = vpop.f32.mrb[0].mxu0
        %v653 = vpop.f32.mrb[0].mxu0
        %v654 = vadd.f32 %v510, %v653
        %v655 = vpop.f32.mrb[0].mxu0
        %656 = vdwg.mxu0
        %v657 = vmax.f32 %v595, 0.0
        %v658 = vmax.f32 %v598, 0.0
        %v659 = vmax.f32 %v603, 0.0
        %v660 = vmax.f32 %v606, 0.0
        %v661 = vmax.f32 %v611, 0.0
        %v662 = vmax.f32 %v614, 0.0
        %v663 = vmax.f32 %v619, 0.0
        %v664 = vmax.f32 %v622, 0.0
        %v665 = vmax.f32 %v627, 0.0
        %v666 = vmax.f32 %v630, 0.0
        %v667 = vmax.f32 %v635, 0.0
        %v668 = vmax.f32 %v638, 0.0
        %v669 = vmax.f32 %v643, 0.0
        %v670 = vmax.f32 %v646, 0.0
        %v671 = vmax.f32 %v651, 0.0
        %v672 = vmax.f32 %v654, 0.0
        %v673 = vld [vmem:[%s6] sm:$0x7]
        %v674 = vpack.c.bf16 %v658, %v657
        %v675 = vpack.c.bf16 %v660, %v659
        %v676 = vpack.c.bf16 %v662, %v661
        %v677 = vpack.c.bf16 %v664, %v663
        %v678 = vpack.c.bf16 %v666, %v665
        %v679 = vpack.c.bf16 %v668, %v667
        %v680 = vpack.c.bf16 %v670, %v669
        %v681 = vpack.c.bf16 %v672, %v671
        %v682 = vld [vmem:[%s5] sm:$0xf]
        %v683 = vld [vmem:[%s5 + $0x4] sm:$0xf]
        %v684 = vld [vmem:[%s5 + $0x8] sm:$0xf]
        %v685 = vld [vmem:[%s5 + $0xc] sm:$0xf]
        %v686 = vld [vmem:[%s5 + $0x10] sm:$0xf]
        %v687 = vld [vmem:[%s5 + $0x14] sm:$0xf]
        %v688 = vld [vmem:[%s5 + $0x18] sm:$0xf]
        %v689 = vld [vmem:[%s5 + $0x1c] sm:$0xf]
        %v690 = vld [vmem:[%s5 + $0x20] sm:$0xf]
        %v691 = vld [vmem:[%s5 + $0x24] sm:$0xf]
        %v692 = vld [vmem:[%s5 + $0x28] sm:$0xf]
        %v693 = vld [vmem:[%s5 + $0x2c] sm:$0xf]
        %v694 = vld [vmem:[%s5 + $0x30] sm:$0xf]
        %v695 = vld [vmem:[%s5 + $0x34] sm:$0xf]
        %v696 = vld [vmem:[%s5 + $0x38] sm:$0xf]
        %v697 = vld [vmem:[%s5 + $0x3c] sm:$0xf]
        %v698 = vlaneseq
        %v699 = vshrl.u32 %v698, 7
        %v700 = vsub.s32 0, %v699
        %v701 = vrot.slane %v673, %v700
        %v718 = vunpack.c.l.b16 %v682
        %v719 = vunpack.c.l.b16 %v683
        %v720 = vunpack.c.l.b16 %v684
        %v721 = vunpack.c.l.b16 %v685
        %v722 = vunpack.c.l.b16 %v686
        %v723 = vunpack.c.l.b16 %v687
        %v724 = vunpack.c.l.b16 %v688
        %v725 = vunpack.c.l.b16 %v689
        %v726 = vunpack.c.l.b16 %v690
        %v727 = vunpack.c.l.b16 %v691
        %v728 = vunpack.c.l.b16 %v692
        %v729 = vunpack.c.l.b16 %v693
        %v730 = vunpack.c.l.b16 %v694
        %v731 = vunpack.c.l.b16 %v695
        %v732 = vunpack.c.l.b16 %v696
        %v733 = vunpack.c.l.b16 %v697
        %v734 = vpack.c.b16 %v719, %v718
        %v735 = vpack.c.b16 %v721, %v720
        %v736 = vpack.c.b16 %v723, %v722
        %v737 = vpack.c.b16 %v725, %v724
        %v738 = vpack.c.b16 %v727, %v726
        %v739 = vpack.c.b16 %v729, %v728
        %v740 = vpack.c.b16 %v731, %v730
        %v741 = vpack.c.b16 %v733, %v732
        %750 = vmatprep.subr.bf16.mxu0 0
        %751 = vmatpush1.bf16.msra.mxu0 %v734
        %752 = vmatprep.subr.bf16.mxu0 0
        %753 = vmatpush1.bf16.msra.mxu0 %v735
        %754 = vmatprep.subr.bf16.mxu0 0
        %755 = vmatpush1.bf16.msra.mxu0 %v736
        %756 = vmatprep.subr.bf16.mxu0 0
        %757 = vmatpush1.bf16.msra.mxu0 %v737
        %758 = vmatprep.subr.bf16.mxu0 0
        %759 = vmatpush1.bf16.msra.mxu0 %v738
        %760 = vmatprep.subr.bf16.mxu0 0
        %761 = vmatpush1.bf16.msra.mxu0 %v739
        %762 = vmatprep.subr.bf16.mxu0 0
        %763 = vmatpush1.bf16.msra.mxu0 %v740
        %764 = vmatprep.subr.bf16.mxu0 0
        %765 = vmatpush1.bf16.msra.mxu0 %v741
        %766 = vmatprep.subr.bf16.mxu0 0
        %767 = vmatpush1.bf16.msra.mxu0 0
        %768 = vmatprep.subr.bf16.mxu0 0
        %769 = vmatpush1.bf16.msra.mxu0 0
        %770 = vmatprep.subr.bf16.mxu0 0
        %771 = vmatpush1.bf16.msra.mxu0 0
        %772 = vmatprep.subr.bf16.mxu0 0
        %773 = vmatpush1.bf16.msra.mxu0 0
        %774 = vmatprep.subr.bf16.mxu0 0
        %775 = vmatpush1.bf16.msra.mxu0 0
        %776 = vmatprep.subr.bf16.mxu0 0
        %777 = vmatpush1.bf16.msra.mxu0 0
        %778 = vmatprep.subr.bf16.mxu0 0
        %779 = vmatpush1.bf16.msra.mxu0 0
        %780 = vmatprep.subr.bf16.mxu0 0
        %781 = vmatpush1.bf16.msra.mxu0 0
        %782 = vmatprep.mubr.bf16.mxu0 0
        %783 = vmatmul.mubr.bf16.gmra.mrb[0].mxu0 %v674
        %v784 = vpop.f32.mrb[0].mxu0
        %v785 = vadd.f32 %v701, %v784
        %v786 = vpop.f32.mrb[0].mxu0
        %v787 = vpop.f32.mrb[0].mxu0
        %v788 = vadd.f32 %v701, %v787
        %v789 = vpop.f32.mrb[0].mxu0
        %790 = vmatprep.mubr.bf16.mxu0 0
        %791 = vmatmul.mubr.bf16.gmra.mrb[0].mxu0 %v675
        %v792 = vpop.f32.mrb[0].mxu0
        %v793 = vadd.f32 %v701, %v792
        %v794 = vpop.f32.mrb[0].mxu0
        %v795 = vpop.f32.mrb[0].mxu0
        %v796 = vadd.f32 %v701, %v795
        %v797 = vpop.f32.mrb[0].mxu0
        %798 = vmatprep.mubr.bf16.mxu0 0
        %799 = vmatmul.mubr.bf16.gmra.mrb[0].mxu0 %v676
        %v800 = vpop.f32.mrb[0].mxu0
        %v801 = vadd.f32 %v701, %v800
        %v802 = vpop.f32.mrb[0].mxu0
        %v803 = vpop.f32.mrb[0].mxu0
        %v804 = vadd.f32 %v701, %v803
        %v805 = vpop.f32.mrb[0].mxu0
        %806 = vmatprep.mubr.bf16.mxu0 0
        %807 = vmatmul.mubr.bf16.gmra.mrb[0].mxu0 %v677
        %v808 = vpop.f32.mrb[0].mxu0
        %v809 = vadd.f32 %v701, %v808
        %v810 = vpop.f32.mrb[0].mxu0
        %v811 = vpop.f32.mrb[0].mxu0
        %v812 = vadd.f32 %v701, %v811
        %v813 = vpop.f32.mrb[0].mxu0
        %814 = vmatprep.mubr.bf16.mxu0 0
        %815 = vmatmul.mubr.bf16.gmra.mrb[0].mxu0 %v678
        %v816 = vpop.f32.mrb[0].mxu0
        %v817 = vadd.f32 %v701, %v816
        %v818 = vpop.f32.mrb[0].mxu0
        %v819 = vpop.f32.mrb[0].mxu0
        %v820 = vadd.f32 %v701, %v819
        %v821 = vpop.f32.mrb[0].mxu0
        %822 = vmatprep.mubr.bf16.mxu0 0
        %823 = vmatmul.mubr.bf16.gmra.mrb[0].mxu0 %v679
        %v824 = vpop.f32.mrb[0].mxu0
        %v825 = vadd.f32 %v701, %v824
        %v826 = vpop.f32.mrb[0].mxu0
        %v827 = vpop.f32.mrb[0].mxu0
        %v828 = vadd.f32 %v701, %v827
        %v829 = vpop.f32.mrb[0].mxu0
        %830 = vmatprep.mubr.bf16.mxu0 0
        %831 = vmatmul.mubr.bf16.gmra.mrb[0].mxu0 %v680
        %v832 = vpop.f32.mrb[0].mxu0
        %v833 = vadd.f32 %v701, %v832
        %v834 = vpop.f32.mrb[0].mxu0
        %v835 = vpop.f32.mrb[0].mxu0
        %v836 = vadd.f32 %v701, %v835
        %v837 = vpop.f32.mrb[0].mxu0
        %838 = vmatprep.mubr.bf16.mxu0 0
        %839 = vmatmul.mubr.bf16.gmra.mrb[0].mxu0 %v681
        %v840 = vpop.f32.mrb[0].mxu0
        %v841 = vadd.f32 %v701, %v840
        %v842 = vpop.f32.mrb[0].mxu0
        %v843 = vpop.f32.mrb[0].mxu0
        %v844 = vadd.f32 %v701, %v843
        %v845 = vpop.f32.mrb[0].mxu0
        %846 = vdwg.mxu0
        %v847 = vtanh.pop %v785
        %v848 = vtanh.pop %v788
        %v849 = vtanh.pop %v793
        %v850 = vtanh.pop %v796
        %v851 = vtanh.pop %v801
        %v852 = vtanh.pop %v804
        %v853 = vtanh.pop %v809
        %v854 = vtanh.pop %v812
        %v855 = vtanh.pop %v817
        %v856 = vtanh.pop %v820
        %v857 = vtanh.pop %v825
        %v858 = vtanh.pop %v828
        %v859 = vtanh.pop %v833
        %v860 = vtanh.pop %v836
        %v861 = vtanh.pop %v841
        %v862 = vtanh.pop %v844
        %v863 = vlaneseq
        %v864 = vshrl.u32 %v863, 7
        %v865 = vsub.s32 1, %v864
        %v866 = vrot.slane %v673, %v865
        %v867 = vmul.f32 %v847, %v866
        %v868 = vmul.f32 %v848, %v866
        %v869 = vmul.f32 %v849, %v866
        %v870 = vmul.f32 %v850, %v866
        %v871 = vmul.f32 %v851, %v866
        %v872 = vmul.f32 %v852, %v866
        %v873 = vmul.f32 %v853, %v866
        %v874 = vmul.f32 %v854, %v866
        %v875 = vmul.f32 %v855, %v866
        %v876 = vmul.f32 %v856, %v866
        %v877 = vmul.f32 %v857, %v866
        %v878 = vmul.f32 %v858, %v866
        %v879 = vmul.f32 %v859, %v866
        %v880 = vmul.f32 %v860, %v866
        %v881 = vmul.f32 %v861, %v866
        %v882 = vmul.f32 %v862, %v866
        %v883 = vlaneseq
        %v884 = vshrl.u32 %v883, 7
        %v885 = vsub.s32 2, %v884
        %v886 = vrot.slane %v673, %v885
        %v887 = vadd.f32 %v867, %v886
        %v888 = vadd.f32 %v868, %v886
        %v889 = vadd.f32 %v869, %v886
        %v890 = vadd.f32 %v870, %v886
        %v891 = vadd.f32 %v871, %v886
        %v892 = vadd.f32 %v872, %v886
        %v893 = vadd.f32 %v873, %v886
        %v894 = vadd.f32 %v874, %v886
        %v895 = vadd.f32 %v875, %v886
        %v896 = vadd.f32 %v876, %v886
        %v897 = vadd.f32 %v877, %v886
        %v898 = vadd.f32 %v878, %v886
        %v899 = vadd.f32 %v879, %v886
        %v900 = vadd.f32 %v880, %v886
        %v901 = vadd.f32 %v881, %v886
        %v902 = vadd.f32 %v882, %v886
        %v903 = vpack.c.bf16 %v888, %v887
        %v904 = vpack.c.bf16 %v890, %v889
        %v905 = vpack.c.bf16 %v892, %v891
        %v906 = vpack.c.bf16 %v894, %v893
        %v907 = vpack.c.bf16 %v896, %v895
        %v908 = vpack.c.bf16 %v898, %v897
        %v909 = vpack.c.bf16 %v900, %v899
        %v910 = vpack.c.bf16 %v902, %v901
        %v919 = vunpack.c.l.b16 %v903
        %v920 = vunpack.c.h.b16 %v903
        %v921 = vunpack.c.l.b16 %v904
        %v922 = vunpack.c.h.b16 %v904
        %v923 = vunpack.c.l.b16 %v905
        %v924 = vunpack.c.h.b16 %v905
        %v925 = vunpack.c.l.b16 %v906
        %v926 = vunpack.c.h.b16 %v906
        %v927 = vunpack.c.l.b16 %v907
        %v928 = vunpack.c.h.b16 %v907
        %v929 = vunpack.c.l.b16 %v908
        %v930 = vunpack.c.h.b16 %v908
        %v931 = vunpack.c.l.b16 %v909
        %v932 = vunpack.c.h.b16 %v909
        %v933 = vunpack.c.l.b16 %v910
        %v934 = vunpack.c.h.b16 %v910
        %v935 = vpack.c.b16 %v919, %v919
        %v936 = vpack.c.b16 %v920, %v920
        %v937 = vpack.c.b16 %v921, %v921
        %v938 = vpack.c.b16 %v922, %v922
        %v939 = vpack.c.b16 %v923, %v923
        %v940 = vpack.c.b16 %v924, %v924
        %v941 = vpack.c.b16 %v925, %v925
        %v942 = vpack.c.b16 %v926, %v926
        %v943 = vpack.c.b16 %v927, %v927
        %v944 = vpack.c.b16 %v928, %v928
        %v945 = vpack.c.b16 %v929, %v929
        %v946 = vpack.c.b16 %v930, %v930
        %v947 = vpack.c.b16 %v931, %v931
        %v948 = vpack.c.b16 %v932, %v932
        %v949 = vpack.c.b16 %v933, %v933
        %v950 = vpack.c.b16 %v934, %v934
        %967 = vst [vmem:[%s280] sm:$0xf] %v935
        %968 = vst [vmem:[%s280 + $0x4] sm:$0xf] %v936
        %969 = vst [vmem:[%s280 + $0x8] sm:$0xf] %v937
        %970 = vst [vmem:[%s280 + $0xc] sm:$0xf] %v938
        %971 = vst [vmem:[%s280 + $0x10] sm:$0xf] %v939
        %972 = vst [vmem:[%s280 + $0x14] sm:$0xf] %v940
        %973 = vst [vmem:[%s280 + $0x18] sm:$0xf] %v941
        %974 = vst [vmem:[%s280 + $0x1c] sm:$0xf] %v942
        %975 = vst [vmem:[%s280 + $0x20] sm:$0xf] %v943
        %976 = vst [vmem:[%s280 + $0x24] sm:$0xf] %v944
        %977 = vst [vmem:[%s280 + $0x28] sm:$0xf] %v945
        %978 = vst [vmem:[%s280 + $0x2c] sm:$0xf] %v946
        %979 = vst [vmem:[%s280 + $0x30] sm:$0xf] %v947
        %980 = vst [vmem:[%s280 + $0x34] sm:$0xf] %v948
        %981 = vst [vmem:[%s280 + $0x38] sm:$0xf] %v949
        %982 = vst [vmem:[%s280 + $0x3c] sm:$0xf] %v950
        %s983 = sand.u32 %s178, 1
        %s984 = sand.u32 %s178, 1
        %s985 = smul.addr %s984, 64
        %s986 = scalar_lea.vmem [#allocation2], %s985
        // Predicated region
        $region49: #{fwd.1} parent=47 // pred_check
          %p987 = pneg %p188
        $region50: #{fwd.1} parent=47 // pred_check_branch
          %989 = sbr.rel (%p987) target = $region52
        $region51: #{fwd.1} parent=47 // pred_region
          %s990 = smul.u32 16, %s18
          %s991 = ssub.s32 25, %s990
          %p992 = scmp.lt.s32.totalorder %s991, 16
          %s993 = scalar_select %p992, %s991, 16
          %s994 = smul.u32 64, %s993
          %p995 = scmp.ne.s32.totalorder 0, %s994
          %s996 = smul.addr %s990, 4
          %s997 = scalar_lea.vmem %s7, %s996
          // Predicated region
          $region53: #{fwd.1} parent=51 // pred_check
            %p998 = pneg %p995
          $region54: #{fwd.1} parent=51 // pred_check_branch
            %1000 = sbr.rel (%p998) target = $region56
          $region55: #{fwd.1} parent=51 // pred_region
            // Predicated region
            $region57: #{fwd.1} parent=55 // pred_check
              _
            $region58: #{fwd.1} parent=55 // pred_check_branch
              %1002 = sbr.rel target = $region60
            $region59: #{fwd.1} parent=55 // pred_region
              // Predicated region
              $region79: #{fwd.1} parent=59 // pred_check
                _
              $region80: #{fwd.1} parent=59 // pred_check_branch
                %1081 = sbr.rel (0) target = $region82
              $region81: #{fwd.1} parent=59 // pred_region
                %s1083 = sshrl.u32 %s993, 4
                // While loop
                $region83: #{fwd.1} parent=81 // loop_pre_header
                  _
                $region84: #{fwd.1} parent=81 // loop_header
                  %s1085 = sphi 0, %s1087
                  %p1086 = scmp.ge.s32.totalorder %s1085, %s1083
                  %s1090 = sphi 0, %s1127
                  %s1091 = sphi %s986, %s1130
                  %s1092 = sphi %s997, %s1131
                $region85: #{fwd.1} parent=81 // loop_header_branch
                  %1089 = sbr.rel (%p1086) target = $region89
                $region86: #{fwd.1} parent=81 // loop_body
                  %v1093 = vld [vmem:[%s1091] sm:$0xf]
                  %1094 = vst [vmem:[%s1092] sm:$0xf] %v1093
                  %v1095 = vld [vmem:[%s1091 + $0x4] sm:$0xf]
                  %1096 = vst [vmem:[%s1092 + $0x4] sm:$0xf] %v1095
                  %v1097 = vld [vmem:[%s1091 + $0x8] sm:$0xf]
                  %1098 = vst [vmem:[%s1092 + $0x8] sm:$0xf] %v1097
                  %v1099 = vld [vmem:[%s1091 + $0xc] sm:$0xf]
                  %1100 = vst [vmem:[%s1092 + $0xc] sm:$0xf] %v1099
                  %v1101 = vld [vmem:[%s1091 + $0x10] sm:$0xf]
                  %1102 = vst [vmem:[%s1092 + $0x10] sm:$0xf] %v1101
                  %v1103 = vld [vmem:[%s1091 + $0x14] sm:$0xf]
                  %1104 = vst [vmem:[%s1092 + $0x14] sm:$0xf] %v1103
                  %v1105 = vld [vmem:[%s1091 + $0x18] sm:$0xf]
                  %1106 = vst [vmem:[%s1092 + $0x18] sm:$0xf] %v1105
                  %v1107 = vld [vmem:[%s1091 + $0x1c] sm:$0xf]
                  %1108 = vst [vmem:[%s1092 + $0x1c] sm:$0xf] %v1107
                  %v1109 = vld [vmem:[%s1091 + $0x20] sm:$0xf]
                  %1110 = vst [vmem:[%s1092 + $0x20] sm:$0xf] %v1109
                  %v1111 = vld [vmem:[%s1091 + $0x24] sm:$0xf]
                  %1112 = vst [vmem:[%s1092 + $0x24] sm:$0xf] %v1111
                  %v1113 = vld [vmem:[%s1091 + $0x28] sm:$0xf]
                  %1114 = vst [vmem:[%s1092 + $0x28] sm:$0xf] %v1113
                  %v1115 = vld [vmem:[%s1091 + $0x2c] sm:$0xf]
                  %1116 = vst [vmem:[%s1092 + $0x2c] sm:$0xf] %v1115
                  %v1117 = vld [vmem:[%s1091 + $0x30] sm:$0xf]
                  %1118 = vst [vmem:[%s1092 + $0x30] sm:$0xf] %v1117
                  %v1119 = vld [vmem:[%s1091 + $0x34] sm:$0xf]
                  %1120 = vst [vmem:[%s1092 + $0x34] sm:$0xf] %v1119
                  %v1121 = vld [vmem:[%s1091 + $0x38] sm:$0xf]
                  %1122 = vst [vmem:[%s1092 + $0x38] sm:$0xf] %v1121
                  %v1123 = vld [vmem:[%s1091 + $0x3c] sm:$0xf]
                  %1124 = vst [vmem:[%s1092 + $0x3c] sm:$0xf] %v1123
                  %s1125 = sadd.s32 1, %s1090
                  %p1126 = scmp.ge.s32.totalorder %s1125, %s1083
                  %s1127 = scalar_select %p1126, 0, %s1125
                  %s1128 = smul.u32 %s1127, 64
                  %s1129 = smul.u32 %s1127, 64
                  %s1130 = scalar_lea.vmem %s986, %s1128 [#allocation2]
                  %s1131 = scalar_lea.vmem %s997, %s1129
                $region87: #{fwd.1} parent=81 // loop_footer
                  %s1087 = sadd.s32 %s1085, 1
                $region88: #{fwd.1} parent=81 // loop_footer_branch
                  %1084 = sbr.rel target = $region84
                $region89: #{fwd.1} parent=81 // loop_exit
                  _
                %s1132 = sshrl.u32 %s993, 4
                %s1133 = sand.u32 %s993, 15
                %s1134 = smul.u32 %s1132, 16
                %s1135 = smul.u32 4, %s1134
                %s1136 = scalar_lea.vmem %s986, %s1135 [#allocation2]
                %s1137 = smul.u32 4, %s1134
                %s1138 = scalar_lea.vmem %s997, %s1137
                // While loop
                $region90: #{fwd.1} parent=81 // loop_pre_header
                  _
                $region91: #{fwd.1} parent=81 // loop_header
                  %s1140 = sphi 0, %s1142
                  %p1141 = scmp.ge.s32.totalorder %s1140, %s1133
                  %s1145 = sphi 0, %s1152
                  %s1146 = sphi %s1136, %s1155
                  %s1147 = sphi %s1138, %s1156
                $region92: #{fwd.1} parent=81 // loop_header_branch
                  %1144 = sbr.rel (%p1141) target = $region96
                $region93: #{fwd.1} parent=81 // loop_body
                  %v1148 = vld [vmem:[%s1146] sm:$0xf]
                  %1149 = vst [vmem:[%s1147] sm:$0xf] %v1148
                  %s1150 = sadd.s32 1, %s1145
                  %p1151 = scmp.ge.s32.totalorder %s1150, %s1133
                  %s1152 = scalar_select %p1151, 0, %s1150
                  %s1153 = smul.u32 %s1152, 4
                  %s1154 = smul.u32 %s1152, 4
                  %s1155 = scalar_lea.vmem %s1136, %s1153 [#allocation2]
                  %s1156 = scalar_lea.vmem %s1138, %s1154
                $region94: #{fwd.1} parent=81 // loop_footer
                  %s1142 = sadd.s32 %s1140, 1
                $region95: #{fwd.1} parent=81 // loop_footer_branch
                  %1139 = sbr.rel target = $region91
                $region96: #{fwd.1} parent=81 // loop_exit
                  _
              $region82: #{fwd.1} parent=59 // pred_fallthru
                _
            $region60: #{fwd.1} parent=55 // pred_fallthru
              _
            // Predicated region
            $region61: #{fwd.1} parent=55 // pred_check
              _
            $region62: #{fwd.1} parent=55 // pred_check_branch
              %1004 = sbr.rel (0) target = $region64
            $region63: #{fwd.1} parent=55 // pred_region
              %s1006 = sshrl.u32 %s993, 4
              // While loop
              $region65: #{fwd.1} parent=63 // loop_pre_header
                _
              $region66: #{fwd.1} parent=63 // loop_header
                %s1008 = sphi 0, %s1010
                %p1009 = scmp.ge.s32.totalorder %s1008, %s1006
                %s1013 = sphi 0, %s1050
                %s1014 = sphi %s986, %s1053
                %s1015 = sphi %s997, %s1054
              $region67: #{fwd.1} parent=63 // loop_header_branch
                %1012 = sbr.rel (%p1009) target = $region71
              $region68: #{fwd.1} parent=63 // loop_body
                %v1016 = vld [vmem:[%s1014] sm:$0xf]
                %1017 = vst [vmem:[%s1015] sm:$0xf] %v1016
                %v1018 = vld [vmem:[%s1014 + $0x4] sm:$0xf]
                %1019 = vst [vmem:[%s1015 + $0x4] sm:$0xf] %v1018
                %v1020 = vld [vmem:[%s1014 + $0x8] sm:$0xf]
                %1021 = vst [vmem:[%s1015 + $0x8] sm:$0xf] %v1020
                %v1022 = vld [vmem:[%s1014 + $0xc] sm:$0xf]
                %1023 = vst [vmem:[%s1015 + $0xc] sm:$0xf] %v1022
                %v1024 = vld [vmem:[%s1014 + $0x10] sm:$0xf]
                %1025 = vst [vmem:[%s1015 + $0x10] sm:$0xf] %v1024
                %v1026 = vld [vmem:[%s1014 + $0x14] sm:$0xf]
                %1027 = vst [vmem:[%s1015 + $0x14] sm:$0xf] %v1026
                %v1028 = vld [vmem:[%s1014 + $0x18] sm:$0xf]
                %1029 = vst [vmem:[%s1015 + $0x18] sm:$0xf] %v1028
                %v1030 = vld [vmem:[%s1014 + $0x1c] sm:$0xf]
                %1031 = vst [vmem:[%s1015 + $0x1c] sm:$0xf] %v1030
                %v1032 = vld [vmem:[%s1014 + $0x20] sm:$0xf]
                %1033 = vst [vmem:[%s1015 + $0x20] sm:$0xf] %v1032
                %v1034 = vld [vmem:[%s1014 + $0x24] sm:$0xf]
                %1035 = vst [vmem:[%s1015 + $0x24] sm:$0xf] %v1034
                %v1036 = vld [vmem:[%s1014 + $0x28] sm:$0xf]
                %1037 = vst [vmem:[%s1015 + $0x28] sm:$0xf] %v1036
                %v1038 = vld [vmem:[%s1014 + $0x2c] sm:$0xf]
                %1039 = vst [vmem:[%s1015 + $0x2c] sm:$0xf] %v1038
                %v1040 = vld [vmem:[%s1014 + $0x30] sm:$0xf]
                %1041 = vst [vmem:[%s1015 + $0x30] sm:$0xf] %v1040
                %v1042 = vld [vmem:[%s1014 + $0x34] sm:$0xf]
                %1043 = vst [vmem:[%s1015 + $0x34] sm:$0xf] %v1042
                %v1044 = vld [vmem:[%s1014 + $0x38] sm:$0xf]
                %1045 = vst [vmem:[%s1015 + $0x38] sm:$0xf] %v1044
                %v1046 = vld [vmem:[%s1014 + $0x3c] sm:$0xf]
                %1047 = vst [vmem:[%s1015 + $0x3c] sm:$0xf] %v1046
                %s1048 = sadd.s32 1, %s1013
                %p1049 = scmp.ge.s32.totalorder %s1048, %s1006
                %s1050 = scalar_select %p1049, 0, %s1048
                %s1051 = smul.u32 %s1050, 64
                %s1052 = smul.u32 %s1050, 64
                %s1053 = scalar_lea.vmem %s986, %s1051 [#allocation2]
                %s1054 = scalar_lea.vmem %s997, %s1052
              $region69: #{fwd.1} parent=63 // loop_footer
                %s1010 = sadd.s32 %s1008, 1
              $region70: #{fwd.1} parent=63 // loop_footer_branch
                %1007 = sbr.rel target = $region66
              $region71: #{fwd.1} parent=63 // loop_exit
                _
              %s1055 = sshrl.u32 %s993, 4
              %s1056 = sand.u32 %s993, 15
              %s1057 = smul.u32 %s1055, 16
              %s1058 = smul.u32 4, %s1057
              %s1059 = scalar_lea.vmem %s986, %s1058 [#allocation2]
              %s1060 = smul.u32 4, %s1057
              %s1061 = scalar_lea.vmem %s997, %s1060
              // While loop
              $region72: #{fwd.1} parent=63 // loop_pre_header
                _
              $region73: #{fwd.1} parent=63 // loop_header
                %s1063 = sphi 0, %s1065
                %p1064 = scmp.ge.s32.totalorder %s1063, %s1056
                %s1068 = sphi 0, %s1075
                %s1069 = sphi %s1059, %s1078
                %s1070 = sphi %s1061, %s1079
              $region74: #{fwd.1} parent=63 // loop_header_branch
                %1067 = sbr.rel (%p1064) target = $region78
              $region75: #{fwd.1} parent=63 // loop_body
                %v1071 = vld [vmem:[%s1069] sm:$0xf]
                %1072 = vst [vmem:[%s1070] sm:$0xf] %v1071
                %s1073 = sadd.s32 1, %s1068
                %p1074 = scmp.ge.s32.totalorder %s1073, %s1056
                %s1075 = scalar_select %p1074, 0, %s1073
                %s1076 = smul.u32 %s1075, 4
                %s1077 = smul.u32 %s1075, 4
                %s1078 = scalar_lea.vmem %s1059, %s1076 [#allocation2]
                %s1079 = scalar_lea.vmem %s1061, %s1077
              $region76: #{fwd.1} parent=63 // loop_footer
                %s1065 = sadd.s32 %s1063, 1
              $region77: #{fwd.1} parent=63 // loop_footer_branch
                %1062 = sbr.rel target = $region73
              $region78: #{fwd.1} parent=63 // loop_exit
                _
            $region64: #{fwd.1} parent=55 // pred_fallthru
              _
          $region56: #{fwd.1} parent=51 // pred_fallthru
            _
          %1157 = vnop
        $region52: #{fwd.1} parent=47 // pred_fallthru
          _
      $region48: #{fwd.1} parent=5 // pred_fallthru
        _
      %p1158 = scmp.le.s32.totalorder 2, %s13
      // Predicated region
      $region97: #{fwd.1} parent=5 // pred_check
        %p1159 = pneg %p1158
      $region98: #{fwd.1} parent=5 // pred_check_branch
        %1161 = sbr.rel (%p1159) target = $region100
      $region99: #{fwd.1} parent=5 // pred_region
        %s1162 = ssub.s32 %s13, 2
        // Predicated region
        $region101: #{fwd.1} parent=99 // pred_check
          %p1163 = pneg %p194
        $region102: #{fwd.1} parent=99 // pred_check_branch
          %1165 = sbr.rel (%p1163) target = $region104
        $region103: #{fwd.1} parent=99 // pred_region
          %s1166 = sand.u32 %s179, 1
          %s1167 = sand.u32 %s179, 1
          %s1168 = smul.addr %s1167, 64
          %s1169 = scalar_lea.vmem [#allocation2], %s1168
        $region104: #{fwd.1} parent=99 // pred_fallthru
          _
      $region100: #{fwd.1} parent=5 // pred_fallthru
        _
    $region6: #{fwd.1} parent=1 // loop_footer
      %s17 = sadd.s32 1, %s13
    $region7: #{fwd.1} parent=1 // loop_footer_branch
      %12 = sbr.rel target = $region3
    $region8: #{fwd.1} parent=1 // loop_exit
      _

</llo_original>
